<compile_context>
chip_gen: v6e
topology: v6e:2x2x1
jax: 0.10.0
libtpu: 0.0.40
codegen_flags: <defaults>
</compile_context>

<pallas_src>
import jax
import jax.numpy as jnp
from jax.experimental import pallas as pl
from jax.experimental.pallas import tpu as pltpu


def _round8(n):
    return ((n + 7) // 8) * 8


def _param_offsets(state_dim, hidden_dim):
    """8-row-aligned section offsets inside the packed (R, H) parameter buffer.

    Compacted layout (single-row params share one 8-row block):
      [o_w1x : o_w1x+S)   W1 rows that multiply x                         (S, H)
      [o_vec : o_vec+8)   row0=w1c, row1=w1t, row2=b1, row3=b2, row4=b3 (b3 in first S lanes)
      [o_w2  : o_w2+H)    W2                                              (H, H)
      [o_w3  : o_w3+H)    W3 stored in the first S lanes                  (H, S)
    """
    o_w1x = 0
    o_vec = o_w1x + _round8(state_dim)
    o_w2 = o_vec + 8
    o_w3 = o_w2 + _round8(hidden_dim)
    total = o_w3 + _round8(hidden_dim)
    return (o_w1x, o_vec, o_w2, o_w3), total


def pack_params(params):
    """Packs (w1, b1, w2, b2, w3, b3) into one contiguous f32 (R, H) buffer.

    Weights are (in_features, out_features); the first S rows of w1 multiply x,
    row S multiplies current_at_t, row S+1 multiplies t (matching the PyTorch
    concat order [x, current, time]).  Call ONCE, outside any solver loop.
    """
    w1, b1, w2, b2, w3, b3 = params
    d_in, hidden_dim = w1.shape
    state_dim = w3.shape[1]
    assert d_in == state_dim + 2
    assert hidden_dim >= state_dim  # w3/b3 live in the first S lanes of the buffer

    (o_w1x, o_vec, o_w2, o_w3), total = _param_offsets(state_dim, hidden_dim)
    packed = jnp.zeros((total, hidden_dim), jnp.float32)
    packed = packed.at[o_w1x:o_w1x + state_dim, :].set(w1[:state_dim].astype(jnp.float32))

    vec = jnp.zeros((8, hidden_dim), jnp.float32)
    vec = vec.at[0, :].set(w1[state_dim].astype(jnp.float32))              # w1c
    vec = vec.at[1, :].set(w1[state_dim + 1].astype(jnp.float32))          # w1t
    vec = vec.at[2, :].set(b1.reshape(-1).astype(jnp.float32))             # b1
    vec = vec.at[3, :].set(b2.reshape(-1).astype(jnp.float32))             # b2
    vec = vec.at[4, :state_dim].set(b3.reshape(-1).astype(jnp.float32))    # b3
    packed = packed.at[o_vec:o_vec + 8, :].set(vec)

    packed = packed.at[o_w2:o_w2 + hidden_dim, :].set(w2.astype(jnp.float32))
    packed = packed.at[o_w3:o_w3 + hidden_dim, :state_dim].set(w3.astype(jnp.float32))
    return packed


# --------------------------------------------------------------------------
# In-kernel helpers (shared by the single-step and the fused-trajectory kernel)
# --------------------------------------------------------------------------
def _slice_params(p_ref, state_dim, hidden_dim, offs):
    """Static, sublane-aligned slices of the packed parameter buffer (loaded once)."""
    o_w1x, o_vec, o_w2, o_w3 = offs
    S, H = state_dim, hidden_dim
    w1x = p_ref[o_w1x:o_w1x + S, :]
    vec = p_ref[o_vec:o_vec + 8, :]          # one aligned 8-row load
    w2 = p_ref[o_w2:o_w2 + H, :]
    w3 = p_ref[o_w3:o_w3 + H, :]
    return (w1x, vec[0:1, :], vec[1:2, :], vec[2:3, :], vec[3:4, :], vec[4:5, :], w2, w3)


def _gather_current(cp, lane_iota, t, seq_len):
    """current_profile[:, int(t*(T-1))] via a one-hot lane select: (B, T) -> (B, 1).

    idx is clamped to [0, T-1] (review correctness fix).  NOTE: t*(T-1) is
    truncated in float32 while PyTorch's int(t*(T-1)) runs in float64, so
    products within float32 eps of an integer may differ by 1.
    """
    idx = jnp.clip((t * (seq_len - 1)).astype(jnp.int32), 0, seq_len - 1)
    return jnp.sum(jnp.where(lane_iota == idx, cp, 0.0), axis=1, keepdims=True)


def _mlp(x, cur, t, w1x, w1c, w1t, b1, b2, b3, w2, w3):
    """The 3-layer MLP with the PyTorch concat folded into rank-1 updates."""
    h1 = jnp.dot(x, w1x, preferred_element_type=jnp.float32)
    h1 = jnp.maximum(h1 + cur * w1c + t * w1t + b1, 0.0)
    h2 = jnp.dot(h1, w2, preferred_element_type=jnp.float32)
    h2 = jnp.maximum(h2 + b2, 0.0)
    out = jnp.dot(h2, w3, preferred_element_type=jnp.float32)
    return out + b3                          # (B, H); only the first S lanes valid


# --------------------------------------------------------------------------
# Kernel 1: single derivative evaluation (ODEFunc.forward)
# --------------------------------------------------------------------------
def _make_step_kernel(state_dim, hidden_dim, seq_len, offs):
    S = state_dim

    def kernel(t_ref, x_ref, cp_ref, p_ref, o_ref):
        t = t_ref[0]                                           # SMEM scalar
        w1x, w1c, w1t, b1, b2, b3, w2, w3 = _slice_params(p_ref, state_dim, hidden_dim, offs)
        cp = cp_ref[...]
        lane = jax.lax.broadcasted_iota(jnp.int32, cp.shape, 1)
        cur = _gather_current(cp, lane, t, seq_len)            # (B, 1)
        out = _mlp(x_ref[...], cur, t, w1x, w1c, w1t, b1, b2, b3, w2, w3)
        o_ref[...] = out[:, :S].astype(o_ref.dtype)

    return kernel


def ode_func_forward(t, x, current_profile, packed_params):
    """ODEFunc.forward. Fully jittable (t may be a traced scalar -- no host sync)."""
    batch, state_dim = x.shape
    seq_len = current_profile.shape[1]
    hidden_dim = packed_params.shape[1]
    offs, total = _param_offsets(state_dim, hidden_dim)
    assert packed_params.shape[0] == total

    t_arr = jnp.reshape(jnp.asarray(t, jnp.float32), (1,))
    cp = current_profile.reshape(batch, seq_len)               # time on the lane axis

    kernel = _make_step_kernel(state_dim, hidden_dim, seq_len, offs)
    return pl.pallas_call(
        kernel,
        out_shape=jax.ShapeDtypeStruct((batch, state_dim), jnp.float32),
        grid=(),
        in_specs=[
            pl.BlockSpec(memory_space=pltpu.MemorySpace.SMEM),   # t (scalar)
            pl.BlockSpec(memory_space=pltpu.MemorySpace.VMEM),   # x
            pl.BlockSpec(memory_space=pltpu.MemorySpace.VMEM),   # current profile
            pl.BlockSpec(memory_space=pltpu.MemorySpace.VMEM),   # packed params
        ],
        out_specs=pl.BlockSpec(memory_space=pltpu.MemorySpace.VMEM),
    )(t_arr, x, cp, packed_params)


# --------------------------------------------------------------------------
# Kernel 2: fused fixed-step Euler solve (solver loop hoisted into the kernel)
# --------------------------------------------------------------------------
def _make_traj_kernel(state_dim, hidden_dim, seq_len, offs, n_steps):
    S = state_dim

    def kernel(sc_ref, x0_ref, cp_ref, p_ref, traj_ref):
        t0 = sc_ref[0]
        dt = sc_ref[1]
        # Params / profile sliced & loaded ONCE, resident in VMEM for all steps.
        w1x, w1c, w1t, b1, b2, b3, w2, w3 = _slice_params(p_ref, state_dim, hidden_dim, offs)
        cp = cp_ref[...]
        lane = jax.lax.broadcasted_iota(jnp.int32, cp.shape, 1)   # hoisted out of loop

        x0 = x0_ref[...]
        traj_ref[0, :, :] = x0

        def body(k, x):
            t = t0 + k.astype(jnp.float32) * dt
            cur = _gather_current(cp, lane, t, seq_len)
            dx = _mlp(x, cur, t, w1x, w1c, w1t, b1, b2, b3, w2, w3)[:, :S]
            x_new = x + dt * dx
            traj_ref[k + 1, :, :] = x_new
            return x_new

        jax.lax.fori_loop(0, n_steps, body, x0)

    return kernel


def ode_solve_trajectory(x0, current_profile, packed_params, n_steps, t0=0.0, t1=1.0):
    """Fixed-step explicit-Euler solve fused into ONE pallas_call.

    Every derivative evaluation inside the loop has exactly the ODEFunc.forward
    semantics; params + profile load once, eliminating per-step launch/DMA cost.
    Returns the trajectory (n_steps + 1, B, S) with trajectory[0] == x0.
    """
    batch, state_dim = x0.shape
    seq_len = current_profile.shape[1]
    hidden_dim = packed_params.shape[1]
    offs, total = _param_offsets(state_dim, hidden_dim)
    assert packed_params.shape[0] == total

    dt = (t1 - t0) / n_steps
    scalars = jnp.array([t0, dt], jnp.float32)
    cp = current_profile.reshape(batch, seq_len)

    kernel = _make_traj_kernel(state_dim, hidden_dim, seq_len, offs, n_steps)
    return pl.pallas_call(
        kernel,
        out_shape=jax.ShapeDtypeStruct((n_steps + 1, batch, state_dim), jnp.float32),
        grid=(),
        in_specs=[
            pl.BlockSpec(memory_space=pltpu.MemorySpace.SMEM),   # [t0, dt]
            pl.BlockSpec(memory_space=pltpu.MemorySpace.VMEM),   # x0
            pl.BlockSpec(memory_space=pltpu.MemorySpace.VMEM),   # current profile
            pl.BlockSpec(memory_space=pltpu.MemorySpace.VMEM),   # packed params
        ],
        out_specs=pl.BlockSpec(memory_space=pltpu.MemorySpace.VMEM),
    )(scalars, x0, cp, packed_params)


# --------------------------------------------------------------------------
# Reference implementations + demo
# --------------------------------------------------------------------------
def init_params(state_dim, hidden_dim, key):
    """Deterministic synthetic parameters (same shapes as the PyTorch module)."""
    k1, k2, k3, k4, k5, k6 = jax.random.split(key, 6)
    d_in = state_dim + 2
    scale = 0.1
    w1 = scale * jax.random.normal(k1, (d_in, hidden_dim), jnp.float32)
    b1 = scale * jax.random.normal(k2, (1, hidden_dim), jnp.float32)
    w2 = scale * jax.random.normal(k3, (hidden_dim, hidden_dim), jnp.float32)
    b2 = scale * jax.random.normal(k4, (1, hidden_dim), jnp.float32)
    w3 = scale * jax.random.normal(k5, (hidden_dim, state_dim), jnp.float32)
    b3 = scale * jax.random.normal(k6, (1, state_dim), jnp.float32)
    return (w1, b1, w2, b2, w3, b3)


def _reference_step(t, x, current_profile, params):
    """Pure-JAX reference mirroring the PyTorch module literally (t: Python float)."""
    w1, b1, w2, b2, w3, b3 = params
    T = current_profile.shape[1]
    time_idx = int(t * (T - 1))
    current_at_t = current_profile[:, time_idx, :]
    time_tensor = jnp.full((x.shape[0], 1), t, dtype=x.dtype)
    inp = jnp.concatenate([x, current_at_t, time_tensor], axis=-1)
    h1 = jnp.maximum(inp @ w1 + b1, 0.0)
    h2 = jnp.maximum(h1 @ w2 + b2, 0.0)
    return h2 @ w3 + b3


def _reference_trajectory(x0, current_profile, params, n_steps, t0=0.0, t1=1.0):
    dt = (t1 - t0) / n_steps
    xs = [x0]
    x = x0
    for k in range(n_steps):
        t = t0 + k * dt
        x = x + dt * _reference_step(t, x, current_profile, params)
        xs.append(x)
    return jnp.stack(xs, axis=0)


if __name__ == "__main__":
    state_dim = 4
    hidden_dim = 32
    batch = 2
    seq = 8          # length of the current profile
    n_steps = 8      # Euler steps for the fused-solve kernel

    key = jax.random.PRNGKey(0)
    kx, kc, kp = jax.random.split(key, 3)

    x0 = jax.random.normal(kx, (batch, state_dim), jnp.float32)
    current_profile = jax.random.normal(kc, (batch, seq, 1), jnp.float32)
    params = init_params(state_dim, hidden_dim, kp)
    packed = pack_params(params)       # one-time packing, outside any solver loop

    # 1) Single derivative evaluation (the module's forward).
    fwd = jax.jit(ode_func_forward)    # t is traced: no host sync per ODE step
    for t in (0.37, 0.9):
        out = jax.block_until_ready(fwd(jnp.float32(t), x0, current_profile, packed))
        ref = _reference_step(t, x0, current_profile, params)
        assert out.shape == (batch, state_dim), out.shape
        assert jnp.allclose(out, ref, atol=1e-5, rtol=1e-5), (t, out, ref)

    # 2) Fused solver loop: whole Euler trajectory from ONE pallas_call.
    solve = jax.jit(ode_solve_trajectory, static_argnames=("n_steps",))
    traj = jax.block_until_ready(solve(x0, current_profile, packed, n_steps=n_steps))
    traj_ref = _reference_trajectory(x0, current_profile, params, n_steps)
    assert traj.shape == (n_steps + 1, batch, state_dim), traj.shape
    assert jnp.allclose(traj, traj_ref, atol=1e-4, rtol=1e-4)

    print("KERNEL_OK")
</pallas_src>

<mosaic_0001>
module attributes {stable_mosaic.version = 11 : i64} {
  func.func @kernel(%arg0: memref<1xf32, #tpu.memory_space<smem>>, %arg1: memref<2x4xf32, #tpu.memory_space<vmem>>, %arg2: memref<2x8xf32, #tpu.memory_space<vmem>>, %arg3: memref<80x32xf32, #tpu.memory_space<vmem>>, %arg4: memref<2x4xf32, #tpu.memory_space<vmem>>) attributes {dimension_semantics = [], scalar_prefetch = 0 : i64, scratch_operands = 0 : i64, tpu.core_type = #tpu.core_type<tc>} {
    %c0 = arith.constant 0 : index
    %0 = memref.load %arg0[%c0] : memref<1xf32, #tpu.memory_space<smem>>
    %c0_0 = arith.constant 0 : index
    %c0_1 = arith.constant 0 : index
    %1 = vector.load %arg3[%c0_0, %c0_1] : memref<80x32xf32, #tpu.memory_space<vmem>>, vector<4x32xf32>
    %c8 = arith.constant 8 : index
    %c0_2 = arith.constant 0 : index
    %2 = vector.load %arg3[%c8, %c0_2] : memref<80x32xf32, #tpu.memory_space<vmem>>, vector<8x32xf32>
    %c16 = arith.constant 16 : index
    %c0_3 = arith.constant 0 : index
    %3 = vector.load %arg3[%c16, %c0_3] : memref<80x32xf32, #tpu.memory_space<vmem>>, vector<32x32xf32>
    %c48 = arith.constant 48 : index
    %c0_4 = arith.constant 0 : index
    %4 = vector.load %arg3[%c48, %c0_4] : memref<80x32xf32, #tpu.memory_space<vmem>>, vector<32x32xf32>
    %5 = vector.extract_strided_slice %2 {offsets = [0, 0], sizes = [1, 32], strides = [1, 1]} : vector<8x32xf32> to vector<1x32xf32>
    %6 = vector.extract_strided_slice %2 {offsets = [1, 0], sizes = [1, 32], strides = [1, 1]} : vector<8x32xf32> to vector<1x32xf32>
    %7 = vector.extract_strided_slice %2 {offsets = [2, 0], sizes = [1, 32], strides = [1, 1]} : vector<8x32xf32> to vector<1x32xf32>
    %8 = vector.extract_strided_slice %2 {offsets = [3, 0], sizes = [1, 32], strides = [1, 1]} : vector<8x32xf32> to vector<1x32xf32>
    %9 = vector.extract_strided_slice %2 {offsets = [4, 0], sizes = [1, 32], strides = [1, 1]} : vector<8x32xf32> to vector<1x32xf32>
    %c0_5 = arith.constant 0 : index
    %c0_6 = arith.constant 0 : index
    %10 = vector.load %arg2[%c0_5, %c0_6] : memref<2x8xf32, #tpu.memory_space<vmem>>, vector<2x8xf32>
    %11 = tpu.iota {dimensions = array<i32: 1>} : vector<2x8xi32>
    %cst = arith.constant 7.000000e+00 : f32
    %12 = arith.mulf %0, %cst : f32
    %13 = arith.fptosi %12 : f32 to i32
    %c0_i32 = arith.constant 0 : i32
    %c7_i32 = arith.constant 7 : i32
    %14 = arith.maxsi %c0_i32, %13 : i32
    %15 = arith.minsi %c7_i32, %14 : i32
    %16 = vector.broadcast %15 : i32 to vector<2x8xi32>
    %17 = arith.cmpi eq, %11, %16 : vector<2x8xi32>
    %cst_7 = arith.constant 0.000000e+00 : f32
    %18 = vector.broadcast %cst_7 : f32 to vector<2x8xf32>
    %19 = arith.select %17, %10, %18 : vector<2x8xi1>, vector<2x8xf32>
    %cst_8 = arith.constant dense<0.000000e+00> : vector<2xf32>
    %20 = vector.multi_reduction <add>, %19, %cst_8 [1] : vector<2x8xf32> to vector<2xf32>
    %21 = vector.shape_cast %20 : vector<2xf32> to vector<2x1xf32>
    %c0_9 = arith.constant 0 : index
    %c0_10 = arith.constant 0 : index
    %22 = vector.load %arg1[%c0_9, %c0_10] : memref<2x4xf32, #tpu.memory_space<vmem>>, vector<2x4xf32>
    %cst_11 = arith.constant dense<0.000000e+00> : vector<2x32xf32>
    %23 = tpu.matmul %22, %1, %cst_11 {dimension_numbers = #tpu.dot_dimension_numbers<[1], [0], [0], [1], [0, 0, 1, 1], [], []>} : vector<2x4xf32>, vector<4x32xf32>, vector<2x32xf32> -> vector<2x32xf32>
    %24 = vector.broadcast %21 : vector<2x1xf32> to vector<2x32xf32>
    %25 = vector.broadcast %5 : vector<1x32xf32> to vector<2x32xf32>
    %26 = arith.mulf %24, %25 : vector<2x32xf32>
    %27 = arith.addf %23, %26 : vector<2x32xf32>
    %28 = vector.broadcast %0 : f32 to vector<1x32xf32>
    %29 = arith.mulf %28, %6 : vector<1x32xf32>
    %30 = vector.broadcast %29 : vector<1x32xf32> to vector<2x32xf32>
    %31 = arith.addf %27, %30 : vector<2x32xf32>
    %32 = vector.broadcast %7 : vector<1x32xf32> to vector<2x32xf32>
    %33 = arith.addf %31, %32 : vector<2x32xf32>
    %cst_12 = arith.constant 0.000000e+00 : f32
    %34 = vector.broadcast %cst_12 : f32 to vector<2x32xf32>
    %35 = arith.maximumf %33, %34 : vector<2x32xf32>
    %cst_13 = arith.constant dense<0.000000e+00> : vector<2x32xf32>
    %36 = tpu.matmul %35, %3, %cst_13 {dimension_numbers = #tpu.dot_dimension_numbers<[1], [0], [0], [1], [0, 0, 1, 1], [], []>} : vector<2x32xf32>, vector<32x32xf32>, vector<2x32xf32> -> vector<2x32xf32>
    %37 = vector.broadcast %8 : vector<1x32xf32> to vector<2x32xf32>
    %38 = arith.addf %36, %37 : vector<2x32xf32>
    %cst_14 = arith.constant 0.000000e+00 : f32
    %39 = vector.broadcast %cst_14 : f32 to vector<2x32xf32>
    %40 = arith.maximumf %38, %39 : vector<2x32xf32>
    %cst_15 = arith.constant dense<0.000000e+00> : vector<2x32xf32>
    %41 = tpu.matmul %40, %4, %cst_15 {dimension_numbers = #tpu.dot_dimension_numbers<[1], [0], [0], [1], [0, 0, 1, 1], [], []>} : vector<2x32xf32>, vector<32x32xf32>, vector<2x32xf32> -> vector<2x32xf32>
    %42 = vector.broadcast %9 : vector<1x32xf32> to vector<2x32xf32>
    %43 = arith.addf %41, %42 : vector<2x32xf32>
    %44 = vector.extract_strided_slice %43 {offsets = [0, 0], sizes = [2, 4], strides = [1, 1]} : vector<2x32xf32> to vector<2x4xf32>
    %c0_16 = arith.constant 0 : index
    %c0_17 = arith.constant 0 : index
    %45 = vector.load %arg4[%c0_16, %c0_17] : memref<2x4xf32, #tpu.memory_space<vmem>>, vector<2x4xf32>
    tpu.vector_store %arg4[%c0_16, %c0_17], %44 {strides = array<i32>} : memref<2x4xf32, #tpu.memory_space<vmem>>, vector<2x4xf32>,
    return
  }
}

</mosaic_0001>

<llo_original>
// kernel: ode_func_forward.1
$region0: #{ode_func_forward.1}
  #allocation0 [shape = 'u32[]', space=smem, size = 0x4, offset = 0x4, fixed_abs, tag = 'smem constant byte address 0x4 - core index']
  #allocation1 [shape = 'u32[144,128]{1,0:T(1,128)}', space=vmem, size = 0x12000, scoped, tag = 'internal scratch']
  #allocation2 [shape = 'f32[1]{0:T(128)S(6)}', space=smem, size = 0x200, scoped, tag = 'scoped memory for ode_func_forward.1']
  %s0 = inlined_call_operand.<no memory space> [shape: f32[1], index: 0, kind: input, shape index: {}]
  %s1 = inlined_call_operand.vmem [shape: f32[2,4], index: 1, kind: input, shape index: {}]
  %s2 = inlined_call_operand.vmem [shape: f32[2,8], index: 2, kind: input, shape index: {}]
  %s3 = inlined_call_operand.vmem [shape: f32[80,32], index: 3, kind: input, shape index: {}]
  %s4 = inlined_call_operand.hbm [shape: f32[2,4], index: 4, kind: output, shape index: {}]
  %s5 = sld [smem:[#allocation0]]
  $region26: #{ode_func_forward.1} parent=0
    _
  %s7 = ssub.s32 1, %s5
  %s8 = scalar_select 0, %s7, %s5
  %9 = sst [smem:[#allocation2]] %s0
  $region1: #{ode_func_forward.1} parent=0
    #allocation3 [shape = 'u8[1024]{0}', space=vmem, size = 0x400, scoped, tag = 'output window, operand 0, single buffered']
    #allocation4 [shape = 's32[1]{0}', space=sflag, size = 0x4, scoped, tag = 'scoped memory for ode_func_forward.1']
    %10 = vsyncpa [#allocation4], 0
    // Predicated region
    $region2: #{ode_func_forward.1} parent=1 // pred_check
      _
    $region3: #{ode_func_forward.1} parent=1 // pred_check_branch
      %12 = sbr.rel (0) target = $region5
    $region4: #{ode_func_forward.1} parent=1 // pred_region
      _
    $region5: #{ode_func_forward.1} parent=1 // pred_fallthru
      _
    // Predicated region
    $region6: #{ode_func_forward.1} parent=1 // pred_check
      _
    $region7: #{ode_func_forward.1} parent=1 // pred_check_branch
      %14 = sbr.rel (0) target = $region9
    $region8: #{ode_func_forward.1} parent=1 // pred_region
      _
    $region9: #{ode_func_forward.1} parent=1 // pred_fallthru
      _
    // Predicated region
    $region10: #{ode_func_forward.1} parent=1 // pred_check
      _
    $region11: #{ode_func_forward.1} parent=1 // pred_check_branch
      %16 = sbr.rel (0) target = $region13
    $region12: #{ode_func_forward.1} parent=1 // pred_region
      _
    $region13: #{ode_func_forward.1} parent=1 // pred_fallthru
      _
    // Predicated region
    $region14: #{ode_func_forward.1} parent=1 // pred_check
      _
    $region15: #{ode_func_forward.1} parent=1 // pred_check_branch
      %18 = sbr.rel (0) target = $region17
    $region16: #{ode_func_forward.1} parent=1 // pred_region
      _
    $region17: #{ode_func_forward.1} parent=1 // pred_fallthru
      _
    %s19 = sld [smem:[#allocation2]]
    %v20 = vld [vmem:[%s3] sm:$0xf]
    %v21 = vld [vmem:[%s3 + $0x8] sm:$0xff]
    %v22 = vld [vmem:[%s3 + $0x10] sm:$0xff]
    %v23 = vld [vmem:[%s3 + $0x18] sm:$0xff]
    %v24 = vld [vmem:[%s3 + $0x20] sm:$0xff]
    %v25 = vld [vmem:[%s3 + $0x28] sm:$0xff]
    %v26 = vld [vmem:[%s3 + $0x30] sm:$0xff]
    %v27 = vld [vmem:[%s3 + $0x38] sm:$0xff]
    %v28 = vld [vmem:[%s3 + $0x40] sm:$0xff]
    %v29 = vld [vmem:[%s3 + $0x48] sm:$0xff]
    %v30 = vld [vmem:[%s2] sm:$0x3]
    %v31 = vlaneseq
    %v32 = vand.u32 %v31, 127
    %s33 = smul.f32 %s19, 7.0
    %s34 = scvt.f32.s32.to.zero.pseudo %s33
    %p35 = scmp.gt.s32.totalorder %s34, 0
    %s36 = scalar_select %p35, %s34, 0
    %p37 = scmp.lt.s32.totalorder %s36, 7
    %s38 = scalar_select %p37, %s36, 7
    %v39 = vstv %s38
    %vm40 = vcmp.eq.s32.totalorder %v32, %v39
    %v41 = vsel %vm40, %v30, 0.0
    %vm42 = vcmask 58368
    %v43 = vsel %vm42, %v41, 0.0
    %44 = vadd.xlane.f32.xlu0 %v43
    %v45 = vpop.xlane.xlu0 %44
    %v46 = vld [vmem:[%s1] sm:$0x3]
    %v47 = vlaneseq
    %v48 = vshrl.u32 %v47, 7
    %v49 = vsub.s32 0, %v48
    %v50 = vrot.slane %v21, %v49
    %v51 = vmul.f32 %v45, %v50
    %vm52 = vcmask 31744
    %v54 = vsel %vm52, %v46, 0
    %vm56 = vcmask 1043456
    %v58 = vsel %vm56, %v20, 0
    %60 = vmatprep.subr.mxu0 0.0
    %61 = vmatpush1.msra.mxu0 0.0
    %62 = vmatprep.subr.mxu0 0.0
    %63 = vmatpush1.msra.mxu0 0.0
    %64 = vmatprep.subr.mxu0 0.0
    %65 = vmatpush1.msra.mxu0 0.0
    %66 = vmatprep.subr.mxu0 0.0
    %67 = vmatpush1.msra.mxu0 0.0
    %68 = vmatprep.subr.mxu0 0.0
    %69 = vmatpush1.msra.mxu0 0.0
    %70 = vmatprep.subr.mxu0 0.0
    %71 = vmatpush1.msra.mxu0 0.0
    %72 = vmatprep.subr.mxu0 0.0
    %73 = vmatpush1.msra.mxu0 0.0
    %74 = vmatprep.subr.mxu0 0.0
    %75 = vmatpush1.msra.mxu0 0.0
    %76 = vmatprep.subr.mxu0 0.0
    %77 = vmatpush1.msra.mxu0 0.0
    %78 = vmatprep.subr.mxu0 0.0
    %79 = vmatpush1.msra.mxu0 0.0
    %80 = vmatprep.subr.mxu0 0.0
    %81 = vmatpush1.msra.mxu0 0.0
    %82 = vmatprep.subr.mxu0 0.0
    %83 = vmatpush1.msra.mxu0 0.0
    %84 = vmatprep.subr.mxu0 0.0
    %85 = vmatpush1.msra.mxu0 0.0
    %86 = vmatprep.subr.mxu0 0.0
    %87 = vmatpush1.msra.mxu0 0.0
    %88 = vmatprep.subr.mxu0 0.0
    %89 = vmatpush1.msra.mxu0 0.0
    %90 = vmatprep.subr.mxu0 0.0
    %91 = vmatpush1.msra.mxu0 %v58
    %92 = vmatprep.subr.mxu0 0.0
    %93 = vmatpush2.msra.mxu0 0.0
    %94 = vmatprep.subr.mxu0 0.0
    %95 = vmatpush2.msra.mxu0 0.0
    %96 = vmatprep.subr.mxu0 0.0
    %97 = vmatpush2.msra.mxu0 0.0
    %98 = vmatprep.subr.mxu0 0.0
    %99 = vmatpush2.msra.mxu0 0.0
    %100 = vmatprep.subr.mxu0 0.0
    %101 = vmatpush2.msra.mxu0 0.0
    %102 = vmatprep.subr.mxu0 0.0
    %103 = vmatpush2.msra.mxu0 0.0
    %104 = vmatprep.subr.mxu0 0.0
    %105 = vmatpush2.msra.mxu0 0.0
    %106 = vmatprep.subr.mxu0 0.0
    %107 = vmatpush2.msra.mxu0 0.0
    %108 = vmatprep.subr.mxu0 0.0
    %109 = vmatpush2.msra.mxu0 0.0
    %110 = vmatprep.subr.mxu0 0.0
    %111 = vmatpush2.msra.mxu0 0.0
    %112 = vmatprep.subr.mxu0 0.0
    %113 = vmatpush2.msra.mxu0 0.0
    %114 = vmatprep.subr.mxu0 0.0
    %115 = vmatpush2.msra.mxu0 0.0
    %116 = vmatprep.subr.mxu0 0.0
    %117 = vmatpush2.msra.mxu0 0.0
    %118 = vmatprep.subr.mxu0 0.0
    %119 = vmatpush2.msra.mxu0 0.0
    %120 = vmatprep.subr.mxu0 0.0
    %121 = vmatpush2.msra.mxu0 0.0
    %122 = vmatprep.subr.mxu0 0.0
    %123 = vmatpush2.msra.mxu0 0.0
    %124 = vmatprep.mubr.f32.mxu0 0.0
    %125 = vmatmul.mubr.f32.gmra.mxu0 %v54
    %v126 = vpop.f32.mrf.mxu0
    %v127 = vadd.f32 %v51, %v126
    %v128 = vpop.f32.mrf.mxu0
    %129 = vdwg.mxu0
    %v130 = vstv %s19
    %v131 = vmul.f32 %v130, %v21
    %v132 = vlaneseq
    %v133 = vshrl.u32 %v132, 7
    %v134 = vsub.s32 1, %v133
    %v135 = vrot.slane %v131, %v134
    %v136 = vadd.f32 %v127, %v135
    %v137 = vlaneseq
    %v138 = vshrl.u32 %v137, 7
    %v139 = vsub.s32 2, %v138
    %v140 = vrot.slane %v21, %v139
    %v141 = vadd.f32 %v136, %v140
    %v142 = vmax.f32 %v141, 0.0
    %v143 = vlaneseq
    %v144 = vshrl.u32 %v143, 7
    %v145 = vsub.s32 3, %v144
    %v146 = vrot.slane %v21, %v145
    %vm147 = vcmask 261120
    %v149 = vsel %vm147, %v142, 0
    %151 = vmatprep.subr.mxu0 0.0
    %152 = vmatpush1.msra.mxu0 0.0
    %153 = vmatprep.subr.mxu0 0.0
    %154 = vmatpush1.msra.mxu0 0.0
    %155 = vmatprep.subr.mxu0 0.0
    %156 = vmatpush1.msra.mxu0 0.0
    %157 = vmatprep.subr.mxu0 0.0
    %158 = vmatpush1.msra.mxu0 0.0
    %159 = vmatprep.subr.mxu0 0.0
    %160 = vmatpush1.msra.mxu0 0.0
    %161 = vmatprep.subr.mxu0 0.0
    %162 = vmatpush1.msra.mxu0 0.0
    %163 = vmatprep.subr.mxu0 0.0
    %164 = vmatpush1.msra.mxu0 0.0
    %165 = vmatprep.subr.mxu0 0.0
    %166 = vmatpush1.msra.mxu0 0.0
    %167 = vmatprep.subr.mxu0 0.0
    %168 = vmatpush1.msra.mxu0 0.0
    %169 = vmatprep.subr.mxu0 0.0
    %170 = vmatpush1.msra.mxu0 0.0
    %171 = vmatprep.subr.mxu0 0.0
    %172 = vmatpush1.msra.mxu0 0.0
    %173 = vmatprep.subr.mxu0 0.0
    %174 = vmatpush1.msra.mxu0 0.0
    %175 = vmatprep.subr.mxu0 0.0
    %176 = vmatpush1.msra.mxu0 %v25
    %177 = vmatprep.subr.mxu0 0.0
    %178 = vmatpush1.msra.mxu0 %v24
    %179 = vmatprep.subr.mxu0 0.0
    %180 = vmatpush1.msra.mxu0 %v23
    %181 = vmatprep.subr.mxu0 0.0
    %182 = vmatpush1.msra.mxu0 %v22
    %183 = vmatprep.subr.mxu0 0.0
    %184 = vmatpush2.msra.mxu0 0.0
    %185 = vmatprep.subr.mxu0 0.0
    %186 = vmatpush2.msra.mxu0 0.0
    %187 = vmatprep.subr.mxu0 0.0
    %188 = vmatpush2.msra.mxu0 0.0
    %189 = vmatprep.subr.mxu0 0.0
    %190 = vmatpush2.msra.mxu0 0.0
    %191 = vmatprep.subr.mxu0 0.0
    %192 = vmatpush2.msra.mxu0 0.0
    %193 = vmatprep.subr.mxu0 0.0
    %194 = vmatpush2.msra.mxu0 0.0
    %195 = vmatprep.subr.mxu0 0.0
    %196 = vmatpush2.msra.mxu0 0.0
    %197 = vmatprep.subr.mxu0 0.0
    %198 = vmatpush2.msra.mxu0 0.0
    %199 = vmatprep.subr.mxu0 0.0
    %200 = vmatpush2.msra.mxu0 0.0
    %201 = vmatprep.subr.mxu0 0.0
    %202 = vmatpush2.msra.mxu0 0.0
    %203 = vmatprep.subr.mxu0 0.0
    %204 = vmatpush2.msra.mxu0 0.0
    %205 = vmatprep.subr.mxu0 0.0
    %206 = vmatpush2.msra.mxu0 0.0
    %207 = vmatprep.subr.mxu0 0.0
    %208 = vmatpush2.msra.mxu0 0.0
    %209 = vmatprep.subr.mxu0 0.0
    %210 = vmatpush2.msra.mxu0 0.0
    %211 = vmatprep.subr.mxu0 0.0
    %212 = vmatpush2.msra.mxu0 0.0
    %213 = vmatprep.subr.mxu0 0.0
    %214 = vmatpush2.msra.mxu0 0.0
    %215 = vmatprep.mubr.f32.mxu0 0.0
    %216 = vmatmul.mubr.f32.gmra.mxu0 %v149
    %v217 = vpop.f32.mrf.mxu0
    %v218 = vadd.f32 %v146, %v217
    %v219 = vpop.f32.mrf.mxu0
    %220 = vdwg.mxu0
    %v221 = vmax.f32 %v218, 0.0
    %v222 = vlaneseq
    %v223 = vshrl.u32 %v222, 7
    %v224 = vsub.s32 4, %v223
    %v225 = vrot.slane %v21, %v224
    %v227 = vsel %vm147, %v221, 0
    %229 = vmatprep.subr.mxu0 0.0
    %230 = vmatpush1.msra.mxu0 0.0
    %231 = vmatprep.subr.mxu0 0.0
    %232 = vmatpush1.msra.mxu0 0.0
    %233 = vmatprep.subr.mxu0 0.0
    %234 = vmatpush1.msra.mxu0 0.0
    %235 = vmatprep.subr.mxu0 0.0
    %236 = vmatpush1.msra.mxu0 0.0
    %237 = vmatprep.subr.mxu0 0.0
    %238 = vmatpush1.msra.mxu0 0.0
    %239 = vmatprep.subr.mxu0 0.0
    %240 = vmatpush1.msra.mxu0 0.0
    %241 = vmatprep.subr.mxu0 0.0
    %242 = vmatpush1.msra.mxu0 0.0
    %243 = vmatprep.subr.mxu0 0.0
    %244 = vmatpush1.msra.mxu0 0.0
    %245 = vmatprep.subr.mxu0 0.0
    %246 = vmatpush1.msra.mxu0 0.0
    %247 = vmatprep.subr.mxu0 0.0
    %248 = vmatpush1.msra.mxu0 0.0
    %249 = vmatprep.subr.mxu0 0.0
    %250 = vmatpush1.msra.mxu0 0.0
    %251 = vmatprep.subr.mxu0 0.0
    %252 = vmatpush1.msra.mxu0 0.0
    %253 = vmatprep.subr.mxu0 0.0
    %254 = vmatpush1.msra.mxu0 %v29
    %255 = vmatprep.subr.mxu0 0.0
    %256 = vmatpush1.msra.mxu0 %v28
    %257 = vmatprep.subr.mxu0 0.0
    %258 = vmatpush1.msra.mxu0 %v27
    %259 = vmatprep.subr.mxu0 0.0
    %260 = vmatpush1.msra.mxu0 %v26
    %261 = vmatprep.subr.mxu0 0.0
    %262 = vmatpush2.msra.mxu0 0.0
    %263 = vmatprep.subr.mxu0 0.0
    %264 = vmatpush2.msra.mxu0 0.0
    %265 = vmatprep.subr.mxu0 0.0
    %266 = vmatpush2.msra.mxu0 0.0
    %267 = vmatprep.subr.mxu0 0.0
    %268 = vmatpush2.msra.mxu0 0.0
    %269 = vmatprep.subr.mxu0 0.0
    %270 = vmatpush2.msra.mxu0 0.0
    %271 = vmatprep.subr.mxu0 0.0
    %272 = vmatpush2.msra.mxu0 0.0
    %273 = vmatprep.subr.mxu0 0.0
    %274 = vmatpush2.msra.mxu0 0.0
    %275 = vmatprep.subr.mxu0 0.0
    %276 = vmatpush2.msra.mxu0 0.0
    %277 = vmatprep.subr.mxu0 0.0
    %278 = vmatpush2.msra.mxu0 0.0
    %279 = vmatprep.subr.mxu0 0.0
    %280 = vmatpush2.msra.mxu0 0.0
    %281 = vmatprep.subr.mxu0 0.0
    %282 = vmatpush2.msra.mxu0 0.0
    %283 = vmatprep.subr.mxu0 0.0
    %284 = vmatpush2.msra.mxu0 0.0
    %285 = vmatprep.subr.mxu0 0.0
    %286 = vmatpush2.msra.mxu0 0.0
    %287 = vmatprep.subr.mxu0 0.0
    %288 = vmatpush2.msra.mxu0 0.0
    %289 = vmatprep.subr.mxu0 0.0
    %290 = vmatpush2.msra.mxu0 0.0
    %291 = vmatprep.subr.mxu0 0.0
    %292 = vmatpush2.msra.mxu0 0.0
    %293 = vmatprep.mubr.f32.mxu0 0.0
    %294 = vmatmul.mubr.f32.gmra.mxu0 %v227
    %v295 = vpop.f32.mrf.mxu0
    %v296 = vadd.f32 %v225, %v295
    %v297 = vpop.f32.mrf.mxu0
    %298 = vdwg.mxu0
    %vm299 = vcmask 25600
    %300 = vst.msk [vmem:[#allocation3] sm:$0x3] %vm299, %v296
    // Predicated region
    $region18: #{ode_func_forward.1} parent=1 // pred_check
      _
    $region19: #{ode_func_forward.1} parent=1 // pred_check_branch
      %302 = sbr.rel (0) target = $region21
    $region20: #{ode_func_forward.1} parent=1 // pred_region
      %s304 = ssub.s32 32, 32
      %305 = vsyncadd [#allocation4], %s304
      %s307 = sshll.u32 [#allocation3], 4
      %s308 = int_to_ptr.vmem [resolvable:$true] %s307
      %310 = dma.vmem_to_hbm [thread:$0]  %s308, 32, %s4, [#allocation4]
    $region21: #{ode_func_forward.1} parent=1 // pred_fallthru
      _
    // Predicated region
    $region22: #{ode_func_forward.1} parent=1 // pred_check
      _
    $region23: #{ode_func_forward.1} parent=1 // pred_check_branch
      %312 = sbr.rel (0) target = $region25
    $region24: #{ode_func_forward.1} parent=1 // pred_region
      %313 = dma.done [#allocation4], 32
    $region25: #{ode_func_forward.1} parent=1 // pred_fallthru
      _
    %314 = vsyncpa [#allocation4], 1

</llo_original>
